<compile_context>
chip_gen: v5e
topology: v5e:2x2
jax: 0.10.0
libtpu: 0.0.40
codegen_flags: <defaults>
</compile_context>

<pallas_src>
import functools

import numpy as np
import jax
import jax.numpy as jnp
from jax.experimental import pallas as pl
from jax.experimental.pallas import tpu as pltpu


# ------------------------------ fused Pallas kernel ------------------------------ #

def _fused_forward_kernel(x_ref, wband_ref, cbias_ref, w1_ref, b1_ref, w2_ref,
                          b2_ref, o_ref, act_ref):
    """Conv(3x3,'same') + ReLU -> Linear -> ReLU -> Linear, fully fused.

    x_ref    : (B*H, KPAD)            band-concatenated padded-NHWC input, rows = (h, b)
    wband_ref: (KPAD, W*C_out)        block-banded conv weight (zero rows in the pad)
    cbias_ref: (1, W*C_out)           conv bias tiled over w
    w1_ref   : (H*W*C_out, HID_PAD)   classifier w1, rows in (h, w, c_out) order
    b1_ref   : (1, HID_PAD)
    w2_ref   : (HID_PAD, n_classes)
    b2_ref   : (1, n_classes)
    o_ref    : (B, n_classes)         logits
    act_ref  : (B*H, W*C_out)         VMEM scratch for the conv activation
    """
    B = o_ref.shape[0]
    rows, lanes = act_ref.shape            # (B*H, W*C_out); lanes == 128 here
    H = rows // B
    hid_pad = w1_ref.shape[1]

    # ---- features: 3x3 'same' conv as ONE banded MXU matmul, bias, ReLU ----
    acc = jnp.dot(x_ref[...], wband_ref[...], preferred_element_type=jnp.float32)
    act_ref[...] = jnp.maximum(acc + cbias_ref[...], 0.0)   # stays resident in VMEM

    # ---- classifier: Linear(H*W*C_out -> hidden) + ReLU + Linear(-> n_classes) ----
    # Dropout layers are identity here because forward() uses use_dropout=False.
    h = jnp.zeros((B, hid_pad), jnp.float32)
    for r in range(H):                     # static unroll (H = 16), reshape-free contraction
        a_r = act_ref[r * B:(r + 1) * B, :]            # (B, W*C_out): conv row r, all batches
        w_r = w1_ref[r * lanes:(r + 1) * lanes, :]     # (W*C_out, hid_pad)
        h = h + jnp.dot(a_r, w_r, preferred_element_type=jnp.float32)
    h = jnp.maximum(h + b1_ref[...], 0.0)
    # TODO(synk): stochastic dropout ensemble (predict()/use_dropout=True) not implemented;
    # forward() always runs the deterministic use_dropout=False path.
    o_ref[...] = jnp.dot(h, w2_ref[...], preferred_element_type=jnp.float32) + b2_ref[...]


@functools.partial(jax.jit, static_argnames=("kh",))
def dropout_policy_forward(x, wband, cbias, w1p, b1p, w2p, b2p, *, kh):
    """x: (B, C_in, H, W) NCHW float32 -> logits (B, n_classes)."""
    B, C_in, H, W = x.shape
    C_out = cbias.shape[1] // W
    n_classes = w2p.shape[1]
    kband = kh * (W + 2) * C_in
    kpad = wband.shape[0]                  # 128-aligned contraction (zero-padded)

    # Minimal host-side prep (~8 KiB, fused under jit): NCHW -> padded NHWC laid out as a
    # 2-D slab with batch-interleaved rows and the KH row-shifted bands concatenated along
    # the contraction axis, so the conv is a single static 2-D matmul in the kernel.
    xt = jnp.transpose(x, (2, 0, 3, 1))                   # (H, B, W, C_in)
    xp = jnp.pad(xt, ((1, 1), (0, 0), (1, 1), (0, 0)))    # (H+2, B, W+2, C_in)
    x3 = jnp.stack([xp[dh:dh + H] for dh in range(kh)], axis=2)   # (H, B, KH, W+2, C_in)
    x2 = x3.reshape(H * B, kband)                         # row = h*B + b, col = (dh, w', c)
    if kpad > kband:
        x2 = jnp.pad(x2, ((0, 0), (0, kpad - kband)))     # align contraction to 128

    return pl.pallas_call(
        _fused_forward_kernel,
        out_shape=jax.ShapeDtypeStruct((B, n_classes), jnp.float32),
        in_specs=[pl.BlockSpec(memory_space=pltpu.MemorySpace.VMEM)
                  for _ in range(7)],
        out_specs=pl.BlockSpec(memory_space=pltpu.MemorySpace.VMEM),
        scratch_shapes=[pltpu.VMEM((B * H, W * C_out), jnp.float32)],
    )(x2, wband, cbias, w1p, b1p, w2p, b2p)


# ---------------------------------- model wrapper --------------------------------- #

class DropoutPolicyPallas:
    """Pallas port of DropoutPolicy.forward (deterministic path, dropout off)."""

    def __init__(self, n_classes=9, M=5, c_in=4, c_out=8, hw=16, hidden=64, seed=1234):
        self.n_classes = n_classes
        self.M = M
        self.c_in, self.c_out, self.hw, self.hidden = c_in, c_out, hw, hidden
        kh = kw = 3
        self.kh = kh
        feat = c_out * hw * hw

        k = jax.random.PRNGKey(seed)
        k_cw, k_cb, k_w1, k_b1, k_w2, k_b2 = jax.random.split(k, 6)
        # deterministic synthetic params in PyTorch layouts (Kaiming-ish scaling)
        conv_w = jax.random.normal(k_cw, (c_out, c_in, kh, kw), jnp.float32) * (
            2.0 / (c_in * kh * kw)) ** 0.5                         # OIHW
        conv_b = jax.random.normal(k_cb, (c_out,), jnp.float32) * 0.01
        w1 = jax.random.normal(k_w1, (feat, hidden), jnp.float32) * (2.0 / feat) ** 0.5
        b1 = jax.random.normal(k_b1, (hidden,), jnp.float32) * 0.01
        w2 = jax.random.normal(k_w2, (hidden, n_classes), jnp.float32) * (1.0 / hidden) ** 0.5
        b2 = jax.random.normal(k_b2, (n_classes,), jnp.float32) * 0.01
        # canonical copies (used by the pure-JAX reference)
        self._conv_w, self._conv_b = conv_w, conv_b
        self._w1, self._b1, self._w2, self._b2 = w1, b1, w2, b2

        # ---------- one-time host-side weight packing for the fused kernel ----------
        W = hw
        cw = np.asarray(conv_w)
        # Block-banded conv weight: band[dh, w', c, w, co] = conv_w[co, c, dh, w'-w]
        # so that (band-concatenated input slab) @ band computes the 'same' conv in one matmul.
        band = np.zeros((kh, W + 2, c_in, W, c_out), np.float32)
        for dh in range(kh):
            for dw in range(kw):
                blk = cw[:, :, dh, dw].T                            # (c_in, c_out)
                for w in range(W):
                    band[dh, w + dw, :, w, :] = blk
        kband = kh * (W + 2) * c_in                                 # 216
        kpad = ((kband + 127) // 128) * 128                         # 256: 128-aligned contraction
        wband = np.zeros((kpad, W * c_out), np.float32)
        wband[:kband, :] = band.reshape(kband, W * c_out)
        self._wband = jnp.asarray(wband)
        self._cbias = jnp.asarray(np.tile(np.asarray(conv_b), W)[None, :])   # (1, W*c_out)

        # Fold the PyTorch NCHW flatten permutation into w1 (rows -> (h, w, c_out) order)
        # and zero-pad hidden 64 -> 128 for full MXU lane utilization (zero cost, exact).
        hid_pad = 128
        w1n = np.asarray(w1).reshape(c_out, hw, hw, hidden)          # (co, h, w, j)
        w1n = np.transpose(w1n, (1, 2, 0, 3)).reshape(feat, hidden)  # row = h*W*c_out + w*c_out + co
        w1p = np.zeros((feat, hid_pad), np.float32)
        w1p[:, :hidden] = w1n
        b1p = np.zeros((1, hid_pad), np.float32)
        b1p[0, :hidden] = np.asarray(b1)
        w2p = np.zeros((hid_pad, n_classes), np.float32)
        w2p[:hidden, :] = np.asarray(w2)
        self._w1p = jnp.asarray(w1p)
        self._b1p = jnp.asarray(b1p)
        self._w2p = jnp.asarray(w2p)
        self._b2p = jnp.asarray(np.asarray(b2)[None, :])

    def forward(self, x):
        """x: (B, C_in, H, W) NCHW float32 -> logits (B, n_classes)."""
        return dropout_policy_forward(x, self._wband, self._cbias, self._w1p,
                                      self._b1p, self._w2p, self._b2p, kh=self.kh)

    def reference_forward(self, x):
        """Pure-JAX (non-Pallas) reference of the same forward pass."""
        conv = jax.lax.conv_general_dilated(
            x, self._conv_w, window_strides=(1, 1), padding="SAME",
            dimension_numbers=("NCHW", "OIHW", "NCHW"),
            precision=jax.lax.Precision.HIGHEST)
        conv = jnp.maximum(conv + self._conv_b.reshape(1, -1, 1, 1), 0.0)
        feat = conv.reshape(x.shape[0], -1)                          # PyTorch NCHW flatten
        h = jnp.maximum(
            jnp.dot(feat, self._w1, precision=jax.lax.Precision.HIGHEST) + self._b1, 0.0)
        return jnp.dot(h, self._w2, precision=jax.lax.Precision.HIGHEST) + self._b2


if __name__ == "__main__":
    key = jax.random.PRNGKey(0)
    x = jax.random.normal(key, (2, 4, 16, 16), jnp.float32)   # NCHW, like PyTorch

    policy = DropoutPolicyPallas(n_classes=9, M=5)
    logits = jax.block_until_ready(policy.forward(x))

    assert logits.shape == (2, 9)
    assert bool(jnp.all(jnp.isfinite(logits)))
    ref = jax.block_until_ready(policy.reference_forward(x))
    assert bool(jnp.allclose(logits, ref, rtol=5e-2, atol=5e-2)), (
        f"Pallas forward mismatch vs reference:\npallas={logits}\nref={ref}")
    print("KERNEL_OK")
</pallas_src>

<mosaic_0001>
module attributes {stable_mosaic.version = 11 : i64} {
  func.func @_fused_forward_kernel(%arg0: memref<32x256xf32, #tpu.memory_space<vmem>>, %arg1: memref<256x128xf32, #tpu.memory_space<vmem>>, %arg2: memref<1x128xf32, #tpu.memory_space<vmem>>, %arg3: memref<2048x128xf32, #tpu.memory_space<vmem>>, %arg4: memref<1x128xf32, #tpu.memory_space<vmem>>, %arg5: memref<128x9xf32, #tpu.memory_space<vmem>>, %arg6: memref<1x9xf32, #tpu.memory_space<vmem>>, %arg7: memref<2x9xf32, #tpu.memory_space<vmem>>, %arg8: memref<32x128xf32, #tpu.memory_space<vmem>>) attributes {dimension_semantics = [], scalar_prefetch = 0 : i64, scratch_operands = 1 : i64, tpu.core_type = #tpu.core_type<tc>} {
    %c0 = arith.constant 0 : index
    %c0_0 = arith.constant 0 : index
    %0 = vector.load %arg0[%c0, %c0_0] : memref<32x256xf32, #tpu.memory_space<vmem>>, vector<32x256xf32>
    %c0_1 = arith.constant 0 : index
    %c0_2 = arith.constant 0 : index
    %1 = vector.load %arg1[%c0_1, %c0_2] : memref<256x128xf32, #tpu.memory_space<vmem>>, vector<256x128xf32>
    %cst = arith.constant dense<0.000000e+00> : vector<32x128xf32>
    %2 = tpu.matmul %0, %1, %cst {dimension_numbers = #tpu.dot_dimension_numbers<[1], [0], [0], [1], [0, 0, 1, 1], [], []>} : vector<32x256xf32>, vector<256x128xf32>, vector<32x128xf32> -> vector<32x128xf32>
    %c0_3 = arith.constant 0 : index
    %c0_4 = arith.constant 0 : index
    %3 = vector.load %arg2[%c0_3, %c0_4] : memref<1x128xf32, #tpu.memory_space<vmem>>, vector<1x128xf32>
    %4 = vector.broadcast %3 : vector<1x128xf32> to vector<32x128xf32>
    %5 = arith.addf %2, %4 : vector<32x128xf32>
    %cst_5 = arith.constant 0.000000e+00 : f32
    %6 = vector.broadcast %cst_5 : f32 to vector<32x128xf32>
    %7 = arith.maximumf %5, %6 : vector<32x128xf32>
    %c0_6 = arith.constant 0 : index
    %c0_7 = arith.constant 0 : index
    %8 = vector.load %arg8[%c0_6, %c0_7] : memref<32x128xf32, #tpu.memory_space<vmem>>, vector<32x128xf32>
    tpu.vector_store %arg8[%c0_6, %c0_7], %7 {strides = array<i32>} : memref<32x128xf32, #tpu.memory_space<vmem>>, vector<32x128xf32>,
    %cst_8 = arith.constant 0.000000e+00 : f32
    %9 = vector.broadcast %cst_8 : f32 to vector<2x128xf32>
    %c0_9 = arith.constant 0 : index
    %c0_10 = arith.constant 0 : index
    %10 = vector.load %arg8[%c0_9, %c0_10] : memref<32x128xf32, #tpu.memory_space<vmem>>, vector<2x128xf32>
    %c0_11 = arith.constant 0 : index
    %c0_12 = arith.constant 0 : index
    %11 = vector.load %arg3[%c0_11, %c0_12] : memref<2048x128xf32, #tpu.memory_space<vmem>>, vector<128x128xf32>
    %cst_13 = arith.constant dense<0.000000e+00> : vector<2x128xf32>
    %12 = tpu.matmul %10, %11, %cst_13 {dimension_numbers = #tpu.dot_dimension_numbers<[1], [0], [0], [1], [0, 0, 1, 1], [], []>} : vector<2x128xf32>, vector<128x128xf32>, vector<2x128xf32> -> vector<2x128xf32>
    %13 = arith.addf %9, %12 : vector<2x128xf32>
    %c2 = arith.constant 2 : index
    %c0_14 = arith.constant 0 : index
    %14 = vector.load %arg8[%c2, %c0_14] : memref<32x128xf32, #tpu.memory_space<vmem>>, vector<2x128xf32>
    %c128 = arith.constant 128 : index
    %c0_15 = arith.constant 0 : index
    %15 = vector.load %arg3[%c128, %c0_15] : memref<2048x128xf32, #tpu.memory_space<vmem>>, vector<128x128xf32>
    %cst_16 = arith.constant dense<0.000000e+00> : vector<2x128xf32>
    %16 = tpu.matmul %14, %15, %cst_16 {dimension_numbers = #tpu.dot_dimension_numbers<[1], [0], [0], [1], [0, 0, 1, 1], [], []>} : vector<2x128xf32>, vector<128x128xf32>, vector<2x128xf32> -> vector<2x128xf32>
    %17 = arith.addf %13, %16 : vector<2x128xf32>
    %c4 = arith.constant 4 : index
    %c0_17 = arith.constant 0 : index
    %18 = vector.load %arg8[%c4, %c0_17] : memref<32x128xf32, #tpu.memory_space<vmem>>, vector<2x128xf32>
    %c256 = arith.constant 256 : index
    %c0_18 = arith.constant 0 : index
    %19 = vector.load %arg3[%c256, %c0_18] : memref<2048x128xf32, #tpu.memory_space<vmem>>, vector<128x128xf32>
    %cst_19 = arith.constant dense<0.000000e+00> : vector<2x128xf32>
    %20 = tpu.matmul %18, %19, %cst_19 {dimension_numbers = #tpu.dot_dimension_numbers<[1], [0], [0], [1], [0, 0, 1, 1], [], []>} : vector<2x128xf32>, vector<128x128xf32>, vector<2x128xf32> -> vector<2x128xf32>
    %21 = arith.addf %17, %20 : vector<2x128xf32>
    %c6 = arith.constant 6 : index
    %c0_20 = arith.constant 0 : index
    %22 = vector.load %arg8[%c6, %c0_20] : memref<32x128xf32, #tpu.memory_space<vmem>>, vector<2x128xf32>
    %c384 = arith.constant 384 : index
    %c0_21 = arith.constant 0 : index
    %23 = vector.load %arg3[%c384, %c0_21] : memref<2048x128xf32, #tpu.memory_space<vmem>>, vector<128x128xf32>
    %cst_22 = arith.constant dense<0.000000e+00> : vector<2x128xf32>
    %24 = tpu.matmul %22, %23, %cst_22 {dimension_numbers = #tpu.dot_dimension_numbers<[1], [0], [0], [1], [0, 0, 1, 1], [], []>} : vector<2x128xf32>, vector<128x128xf32>, vector<2x128xf32> -> vector<2x128xf32>
    %25 = arith.addf %21, %24 : vector<2x128xf32>
    %c8 = arith.constant 8 : index
    %c0_23 = arith.constant 0 : index
    %26 = vector.load %arg8[%c8, %c0_23] : memref<32x128xf32, #tpu.memory_space<vmem>>, vector<2x128xf32>
    %c512 = arith.constant 512 : index
    %c0_24 = arith.constant 0 : index
    %27 = vector.load %arg3[%c512, %c0_24] : memref<2048x128xf32, #tpu.memory_space<vmem>>, vector<128x128xf32>
    %cst_25 = arith.constant dense<0.000000e+00> : vector<2x128xf32>
    %28 = tpu.matmul %26, %27, %cst_25 {dimension_numbers = #tpu.dot_dimension_numbers<[1], [0], [0], [1], [0, 0, 1, 1], [], []>} : vector<2x128xf32>, vector<128x128xf32>, vector<2x128xf32> -> vector<2x128xf32>
    %29 = arith.addf %25, %28 : vector<2x128xf32>
    %c10 = arith.constant 10 : index
    %c0_26 = arith.constant 0 : index
    %30 = vector.load %arg8[%c10, %c0_26] : memref<32x128xf32, #tpu.memory_space<vmem>>, vector<2x128xf32>
    %c640 = arith.constant 640 : index
    %c0_27 = arith.constant 0 : index
    %31 = vector.load %arg3[%c640, %c0_27] : memref<2048x128xf32, #tpu.memory_space<vmem>>, vector<128x128xf32>
    %cst_28 = arith.constant dense<0.000000e+00> : vector<2x128xf32>
    %32 = tpu.matmul %30, %31, %cst_28 {dimension_numbers = #tpu.dot_dimension_numbers<[1], [0], [0], [1], [0, 0, 1, 1], [], []>} : vector<2x128xf32>, vector<128x128xf32>, vector<2x128xf32> -> vector<2x128xf32>
    %33 = arith.addf %29, %32 : vector<2x128xf32>
    %c12 = arith.constant 12 : index
    %c0_29 = arith.constant 0 : index
    %34 = vector.load %arg8[%c12, %c0_29] : memref<32x128xf32, #tpu.memory_space<vmem>>, vector<2x128xf32>
    %c768 = arith.constant 768 : index
    %c0_30 = arith.constant 0 : index
    %35 = vector.load %arg3[%c768, %c0_30] : memref<2048x128xf32, #tpu.memory_space<vmem>>, vector<128x128xf32>
    %cst_31 = arith.constant dense<0.000000e+00> : vector<2x128xf32>
    %36 = tpu.matmul %34, %35, %cst_31 {dimension_numbers = #tpu.dot_dimension_numbers<[1], [0], [0], [1], [0, 0, 1, 1], [], []>} : vector<2x128xf32>, vector<128x128xf32>, vector<2x128xf32> -> vector<2x128xf32>
    %37 = arith.addf %33, %36 : vector<2x128xf32>
    %c14 = arith.constant 14 : index
    %c0_32 = arith.constant 0 : index
    %38 = vector.load %arg8[%c14, %c0_32] : memref<32x128xf32, #tpu.memory_space<vmem>>, vector<2x128xf32>
    %c896 = arith.constant 896 : index
    %c0_33 = arith.constant 0 : index
    %39 = vector.load %arg3[%c896, %c0_33] : memref<2048x128xf32, #tpu.memory_space<vmem>>, vector<128x128xf32>
    %cst_34 = arith.constant dense<0.000000e+00> : vector<2x128xf32>
    %40 = tpu.matmul %38, %39, %cst_34 {dimension_numbers = #tpu.dot_dimension_numbers<[1], [0], [0], [1], [0, 0, 1, 1], [], []>} : vector<2x128xf32>, vector<128x128xf32>, vector<2x128xf32> -> vector<2x128xf32>
    %41 = arith.addf %37, %40 : vector<2x128xf32>
    %c16 = arith.constant 16 : index
    %c0_35 = arith.constant 0 : index
    %42 = vector.load %arg8[%c16, %c0_35] : memref<32x128xf32, #tpu.memory_space<vmem>>, vector<2x128xf32>
    %c1024 = arith.constant 1024 : index
    %c0_36 = arith.constant 0 : index
    %43 = vector.load %arg3[%c1024, %c0_36] : memref<2048x128xf32, #tpu.memory_space<vmem>>, vector<128x128xf32>
    %cst_37 = arith.constant dense<0.000000e+00> : vector<2x128xf32>
    %44 = tpu.matmul %42, %43, %cst_37 {dimension_numbers = #tpu.dot_dimension_numbers<[1], [0], [0], [1], [0, 0, 1, 1], [], []>} : vector<2x128xf32>, vector<128x128xf32>, vector<2x128xf32> -> vector<2x128xf32>
    %45 = arith.addf %41, %44 : vector<2x128xf32>
    %c18 = arith.constant 18 : index
    %c0_38 = arith.constant 0 : index
    %46 = vector.load %arg8[%c18, %c0_38] : memref<32x128xf32, #tpu.memory_space<vmem>>, vector<2x128xf32>
    %c1152 = arith.constant 1152 : index
    %c0_39 = arith.constant 0 : index
    %47 = vector.load %arg3[%c1152, %c0_39] : memref<2048x128xf32, #tpu.memory_space<vmem>>, vector<128x128xf32>
    %cst_40 = arith.constant dense<0.000000e+00> : vector<2x128xf32>
    %48 = tpu.matmul %46, %47, %cst_40 {dimension_numbers = #tpu.dot_dimension_numbers<[1], [0], [0], [1], [0, 0, 1, 1], [], []>} : vector<2x128xf32>, vector<128x128xf32>, vector<2x128xf32> -> vector<2x128xf32>
    %49 = arith.addf %45, %48 : vector<2x128xf32>
    %c20 = arith.constant 20 : index
    %c0_41 = arith.constant 0 : index
    %50 = vector.load %arg8[%c20, %c0_41] : memref<32x128xf32, #tpu.memory_space<vmem>>, vector<2x128xf32>
    %c1280 = arith.constant 1280 : index
    %c0_42 = arith.constant 0 : index
    %51 = vector.load %arg3[%c1280, %c0_42] : memref<2048x128xf32, #tpu.memory_space<vmem>>, vector<128x128xf32>
    %cst_43 = arith.constant dense<0.000000e+00> : vector<2x128xf32>
    %52 = tpu.matmul %50, %51, %cst_43 {dimension_numbers = #tpu.dot_dimension_numbers<[1], [0], [0], [1], [0, 0, 1, 1], [], []>} : vector<2x128xf32>, vector<128x128xf32>, vector<2x128xf32> -> vector<2x128xf32>
    %53 = arith.addf %49, %52 : vector<2x128xf32>
    %c22 = arith.constant 22 : index
    %c0_44 = arith.constant 0 : index
    %54 = vector.load %arg8[%c22, %c0_44] : memref<32x128xf32, #tpu.memory_space<vmem>>, vector<2x128xf32>
    %c1408 = arith.constant 1408 : index
    %c0_45 = arith.constant 0 : index
    %55 = vector.load %arg3[%c1408, %c0_45] : memref<2048x128xf32, #tpu.memory_space<vmem>>, vector<128x128xf32>
    %cst_46 = arith.constant dense<0.000000e+00> : vector<2x128xf32>
    %56 = tpu.matmul %54, %55, %cst_46 {dimension_numbers = #tpu.dot_dimension_numbers<[1], [0], [0], [1], [0, 0, 1, 1], [], []>} : vector<2x128xf32>, vector<128x128xf32>, vector<2x128xf32> -> vector<2x128xf32>
    %57 = arith.addf %53, %56 : vector<2x128xf32>
    %c24 = arith.constant 24 : index
    %c0_47 = arith.constant 0 : index
    %58 = vector.load %arg8[%c24, %c0_47] : memref<32x128xf32, #tpu.memory_space<vmem>>, vector<2x128xf32>
    %c1536 = arith.constant 1536 : index
    %c0_48 = arith.constant 0 : index
    %59 = vector.load %arg3[%c1536, %c0_48] : memref<2048x128xf32, #tpu.memory_space<vmem>>, vector<128x128xf32>
    %cst_49 = arith.constant dense<0.000000e+00> : vector<2x128xf32>
    %60 = tpu.matmul %58, %59, %cst_49 {dimension_numbers = #tpu.dot_dimension_numbers<[1], [0], [0], [1], [0, 0, 1, 1], [], []>} : vector<2x128xf32>, vector<128x128xf32>, vector<2x128xf32> -> vector<2x128xf32>
    %61 = arith.addf %57, %60 : vector<2x128xf32>
    %c26 = arith.constant 26 : index
    %c0_50 = arith.constant 0 : index
    %62 = vector.load %arg8[%c26, %c0_50] : memref<32x128xf32, #tpu.memory_space<vmem>>, vector<2x128xf32>
    %c1664 = arith.constant 1664 : index
    %c0_51 = arith.constant 0 : index
    %63 = vector.load %arg3[%c1664, %c0_51] : memref<2048x128xf32, #tpu.memory_space<vmem>>, vector<128x128xf32>
    %cst_52 = arith.constant dense<0.000000e+00> : vector<2x128xf32>
    %64 = tpu.matmul %62, %63, %cst_52 {dimension_numbers = #tpu.dot_dimension_numbers<[1], [0], [0], [1], [0, 0, 1, 1], [], []>} : vector<2x128xf32>, vector<128x128xf32>, vector<2x128xf32> -> vector<2x128xf32>
    %65 = arith.addf %61, %64 : vector<2x128xf32>
    %c28 = arith.constant 28 : index
    %c0_53 = arith.constant 0 : index
    %66 = vector.load %arg8[%c28, %c0_53] : memref<32x128xf32, #tpu.memory_space<vmem>>, vector<2x128xf32>
    %c1792 = arith.constant 1792 : index
    %c0_54 = arith.constant 0 : index
    %67 = vector.load %arg3[%c1792, %c0_54] : memref<2048x128xf32, #tpu.memory_space<vmem>>, vector<128x128xf32>
    %cst_55 = arith.constant dense<0.000000e+00> : vector<2x128xf32>
    %68 = tpu.matmul %66, %67, %cst_55 {dimension_numbers = #tpu.dot_dimension_numbers<[1], [0], [0], [1], [0, 0, 1, 1], [], []>} : vector<2x128xf32>, vector<128x128xf32>, vector<2x128xf32> -> vector<2x128xf32>
    %69 = arith.addf %65, %68 : vector<2x128xf32>
    %c30 = arith.constant 30 : index
    %c0_56 = arith.constant 0 : index
    %70 = vector.load %arg8[%c30, %c0_56] : memref<32x128xf32, #tpu.memory_space<vmem>>, vector<2x128xf32>
    %c1920 = arith.constant 1920 : index
    %c0_57 = arith.constant 0 : index
    %71 = vector.load %arg3[%c1920, %c0_57] : memref<2048x128xf32, #tpu.memory_space<vmem>>, vector<128x128xf32>
    %cst_58 = arith.constant dense<0.000000e+00> : vector<2x128xf32>
    %72 = tpu.matmul %70, %71, %cst_58 {dimension_numbers = #tpu.dot_dimension_numbers<[1], [0], [0], [1], [0, 0, 1, 1], [], []>} : vector<2x128xf32>, vector<128x128xf32>, vector<2x128xf32> -> vector<2x128xf32>
    %73 = arith.addf %69, %72 : vector<2x128xf32>
    %c0_59 = arith.constant 0 : index
    %c0_60 = arith.constant 0 : index
    %74 = vector.load %arg4[%c0_59, %c0_60] : memref<1x128xf32, #tpu.memory_space<vmem>>, vector<1x128xf32>
    %75 = vector.broadcast %74 : vector<1x128xf32> to vector<2x128xf32>
    %76 = arith.addf %73, %75 : vector<2x128xf32>
    %cst_61 = arith.constant 0.000000e+00 : f32
    %77 = vector.broadcast %cst_61 : f32 to vector<2x128xf32>
    %78 = arith.maximumf %76, %77 : vector<2x128xf32>
    %c0_62 = arith.constant 0 : index
    %c0_63 = arith.constant 0 : index
    %79 = vector.load %arg5[%c0_62, %c0_63] : memref<128x9xf32, #tpu.memory_space<vmem>>, vector<128x9xf32>
    %cst_64 = arith.constant dense<0.000000e+00> : vector<2x9xf32>
    %80 = tpu.matmul %78, %79, %cst_64 {dimension_numbers = #tpu.dot_dimension_numbers<[1], [0], [0], [1], [0, 0, 1, 1], [], []>} : vector<2x128xf32>, vector<128x9xf32>, vector<2x9xf32> -> vector<2x9xf32>
    %c0_65 = arith.constant 0 : index
    %c0_66 = arith.constant 0 : index
    %81 = vector.load %arg6[%c0_65, %c0_66] : memref<1x9xf32, #tpu.memory_space<vmem>>, vector<1x9xf32>
    %82 = vector.broadcast %81 : vector<1x9xf32> to vector<2x9xf32>
    %83 = arith.addf %80, %82 : vector<2x9xf32>
    %c0_67 = arith.constant 0 : index
    %c0_68 = arith.constant 0 : index
    %84 = vector.load %arg7[%c0_67, %c0_68] : memref<2x9xf32, #tpu.memory_space<vmem>>, vector<2x9xf32>
    tpu.vector_store %arg7[%c0_67, %c0_68], %83 {strides = array<i32>} : memref<2x9xf32, #tpu.memory_space<vmem>>, vector<2x9xf32>,
    return
  }
}

</mosaic_0001>

<llo_original>
// kernel: dropout_policy_forward.1
$region0: #{dropout_policy_forward.1}
  #allocation0 [shape = 'u32[]', space=smem, size = 0x4, offset = 0x4, fixed_abs, tag = 'smem constant byte address 0x4 - core index']
  #allocation1 [shape = 'u32[72,128]{1,0:T(1,128)}', space=vmem, size = 0x9000, scoped, tag = 'internal scratch']
  #allocation2 [shape = 'f32[32,128]{1,0:T(8,128)}', space=vmem, size = 0x4000, scoped, tag = 'scratch operand']
  %s0 = inlined_call_operand.vmem [shape: f32[32,256], index: 0, kind: input, shape index: {}]
  %s1 = inlined_call_operand.vmem [shape: f32[256,128], index: 1, kind: input, shape index: {}]
  %s2 = inlined_call_operand.vmem [shape: f32[1,128], index: 2, kind: input, shape index: {}]
  %s3 = inlined_call_operand.vmem [shape: f32[2048,128], index: 3, kind: input, shape index: {}]
  %s4 = inlined_call_operand.vmem [shape: f32[1,128], index: 4, kind: input, shape index: {}]
  %s5 = inlined_call_operand.vmem [shape: f32[128,9], index: 5, kind: input, shape index: {}]
  %s6 = inlined_call_operand.vmem [shape: f32[1,9], index: 6, kind: input, shape index: {}]
  %s7 = inlined_call_operand.hbm [shape: f32[2,9], index: 7, kind: output, shape index: {}]
  %s8 = sld [smem:[#allocation0]]
  $region38: #{dropout_policy_forward.1} parent=0
    _
  %s10 = ssub.s32 1, %s8
  %s11 = scalar_select 0, %s10, %s8
  $region1: #{dropout_policy_forward.1} parent=0
    #allocation3 [shape = 'u8[1024]{0}', space=vmem, size = 0x400, scoped, tag = 'output window, operand 0, single buffered']
    #allocation4 [shape = 's32[1]{0}', space=sflag, size = 0x4, scoped, tag = 'scoped memory for dropout_policy_forward.1']
    %12 = vsyncpa [#allocation4], 0
    // Predicated region
    $region2: #{dropout_policy_forward.1} parent=1 // pred_check
      _
    $region3: #{dropout_policy_forward.1} parent=1 // pred_check_branch
      %14 = sbr.rel (0) target = $region5
    $region4: #{dropout_policy_forward.1} parent=1 // pred_region
      _
    $region5: #{dropout_policy_forward.1} parent=1 // pred_fallthru
      _
    // Predicated region
    $region6: #{dropout_policy_forward.1} parent=1 // pred_check
      _
    $region7: #{dropout_policy_forward.1} parent=1 // pred_check_branch
      %16 = sbr.rel (0) target = $region9
    $region8: #{dropout_policy_forward.1} parent=1 // pred_region
      _
    $region9: #{dropout_policy_forward.1} parent=1 // pred_fallthru
      _
    // Predicated region
    $region10: #{dropout_policy_forward.1} parent=1 // pred_check
      _
    $region11: #{dropout_policy_forward.1} parent=1 // pred_check_branch
      %18 = sbr.rel (0) target = $region13
    $region12: #{dropout_policy_forward.1} parent=1 // pred_region
      _
    $region13: #{dropout_policy_forward.1} parent=1 // pred_fallthru
      _
    // Predicated region
    $region14: #{dropout_policy_forward.1} parent=1 // pred_check
      _
    $region15: #{dropout_policy_forward.1} parent=1 // pred_check_branch
      %20 = sbr.rel (0) target = $region17
    $region16: #{dropout_policy_forward.1} parent=1 // pred_region
      _
    $region17: #{dropout_policy_forward.1} parent=1 // pred_fallthru
      _
    // Predicated region
    $region18: #{dropout_policy_forward.1} parent=1 // pred_check
      _
    $region19: #{dropout_policy_forward.1} parent=1 // pred_check_branch
      %22 = sbr.rel (0) target = $region21
    $region20: #{dropout_policy_forward.1} parent=1 // pred_region
      _
    $region21: #{dropout_policy_forward.1} parent=1 // pred_fallthru
      _
    // Predicated region
    $region22: #{dropout_policy_forward.1} parent=1 // pred_check
      _
    $region23: #{dropout_policy_forward.1} parent=1 // pred_check_branch
      %24 = sbr.rel (0) target = $region25
    $region24: #{dropout_policy_forward.1} parent=1 // pred_region
      _
    $region25: #{dropout_policy_forward.1} parent=1 // pred_fallthru
      _
    // Predicated region
    $region26: #{dropout_policy_forward.1} parent=1 // pred_check
      _
    $region27: #{dropout_policy_forward.1} parent=1 // pred_check_branch
      %26 = sbr.rel (0) target = $region29
    $region28: #{dropout_policy_forward.1} parent=1 // pred_region
      _
    $region29: #{dropout_policy_forward.1} parent=1 // pred_fallthru
      _
    %v27 = vld [vmem:[%s0] sm:$0xff]
    %v28 = vld [vmem:[%s0 + $0x8] sm:$0xff]
    %v29 = vld [vmem:[%s0 + $0x10] sm:$0xff]
    %v30 = vld [vmem:[%s0 + $0x18] sm:$0xff]
    %v31 = vld [vmem:[%s0 + $0x20] sm:$0xff]
    %v32 = vld [vmem:[%s0 + $0x28] sm:$0xff]
    %v33 = vld [vmem:[%s0 + $0x30] sm:$0xff]
    %v34 = vld [vmem:[%s0 + $0x38] sm:$0xff]
    %v35 = vld [vmem:[%s1] sm:$0xff]
    %v36 = vld [vmem:[%s1 + $0x8] sm:$0xff]
    %v37 = vld [vmem:[%s1 + $0x10] sm:$0xff]
    %v38 = vld [vmem:[%s1 + $0x18] sm:$0xff]
    %v39 = vld [vmem:[%s1 + $0x20] sm:$0xff]
    %v40 = vld [vmem:[%s1 + $0x28] sm:$0xff]
    %v41 = vld [vmem:[%s1 + $0x30] sm:$0xff]
    %v42 = vld [vmem:[%s1 + $0x38] sm:$0xff]
    %v43 = vld [vmem:[%s1 + $0x40] sm:$0xff]
    %v44 = vld [vmem:[%s1 + $0x48] sm:$0xff]
    %v45 = vld [vmem:[%s1 + $0x50] sm:$0xff]
    %v46 = vld [vmem:[%s1 + $0x58] sm:$0xff]
    %v47 = vld [vmem:[%s1 + $0x60] sm:$0xff]
    %v48 = vld [vmem:[%s1 + $0x68] sm:$0xff]
    %v49 = vld [vmem:[%s1 + $0x70] sm:$0xff]
    %v50 = vld [vmem:[%s1 + $0x78] sm:$0xff]
    %v51 = vld [vmem:[%s1 + $0x80] sm:$0xff]
    %v52 = vld [vmem:[%s1 + $0x88] sm:$0xff]
    %v53 = vld [vmem:[%s1 + $0x90] sm:$0xff]
    %v54 = vld [vmem:[%s1 + $0x98] sm:$0xff]
    %v55 = vld [vmem:[%s1 + $0xa0] sm:$0xff]
    %v56 = vld [vmem:[%s1 + $0xa8] sm:$0xff]
    %v57 = vld [vmem:[%s1 + $0xb0] sm:$0xff]
    %v58 = vld [vmem:[%s1 + $0xb8] sm:$0xff]
    %v59 = vld [vmem:[%s1 + $0xc0] sm:$0xff]
    %v60 = vld [vmem:[%s1 + $0xc8] sm:$0xff]
    %v61 = vld [vmem:[%s1 + $0xd0] sm:$0xff]
    %v62 = vld [vmem:[%s1 + $0xd8] sm:$0xff]
    %v63 = vld [vmem:[%s1 + $0xe0] sm:$0xff]
    %v64 = vld [vmem:[%s1 + $0xe8] sm:$0xff]
    %v65 = vld [vmem:[%s1 + $0xf0] sm:$0xff]
    %v66 = vld [vmem:[%s1 + $0xf8] sm:$0xff]
    %v67 = vld [vmem:[%s2] sm:$0x1]
    %v69 = vperm.slane %v67, 0
    %71 = vmatpush.msra.mxu0 %v50
    %72 = vmatpush.msra.mxu0 %v49
    %73 = vmatpush.msra.mxu0 %v48
    %74 = vmatpush.msra.mxu0 %v47
    %75 = vmatpush.msra.mxu0 %v46
    %76 = vmatpush.msra.mxu0 %v45
    %77 = vmatpush.msra.mxu0 %v44
    %78 = vmatpush.msra.mxu0 %v43
    %79 = vmatpush.msra.mxu0 %v42
    %80 = vmatpush.msra.mxu0 %v41
    %81 = vmatpush.msra.mxu0 %v40
    %82 = vmatpush.msra.mxu0 %v39
    %83 = vmatpush.msra.mxu0 %v38
    %84 = vmatpush.msra.mxu0 %v37
    %85 = vmatpush.msra.mxu0 %v36
    %86 = vmatpush.msra.mxu0 %v35
    %87 = vmatmul.f32.gmra.mxu0 %v27
    %v88 = vpop.f32.mrf.mxu0
    %v89 = vadd.f32 %v69, %v88
    %90 = vmatmul.f32.gmra.mxu0 %v29
    %v91 = vpop.f32.mrf.mxu0
    %v92 = vadd.f32 %v69, %v91
    %93 = vmatmul.f32.gmra.mxu0 %v31
    %v94 = vpop.f32.mrf.mxu0
    %v95 = vadd.f32 %v69, %v94
    %96 = vmatmul.f32.gmra.mxu0 %v33
    %v97 = vpop.f32.mrf.mxu0
    %v98 = vadd.f32 %v69, %v97
    %99 = vdwg.mxu0
    %100 = vmatpush.msra.mxu0 %v66
    %101 = vmatpush.msra.mxu0 %v65
    %102 = vmatpush.msra.mxu0 %v64
    %103 = vmatpush.msra.mxu0 %v63
    %104 = vmatpush.msra.mxu0 %v62
    %105 = vmatpush.msra.mxu0 %v61
    %106 = vmatpush.msra.mxu0 %v60
    %107 = vmatpush.msra.mxu0 %v59
    %108 = vmatpush.msra.mxu0 %v58
    %109 = vmatpush.msra.mxu0 %v57
    %110 = vmatpush.msra.mxu0 %v56
    %111 = vmatpush.msra.mxu0 %v55
    %112 = vmatpush.msra.mxu0 %v54
    %113 = vmatpush.msra.mxu0 %v53
    %114 = vmatpush.msra.mxu0 %v52
    %115 = vmatpush.msra.mxu0 %v51
    %116 = vmatmul.f32.gmra.mxu0 %v28
    %v117 = vpop.f32.mrf.mxu0
    %v118 = vadd.f32 %v89, %v117
    %119 = vmatmul.f32.gmra.mxu0 %v30
    %v120 = vpop.f32.mrf.mxu0
    %v121 = vadd.f32 %v92, %v120
    %122 = vmatmul.f32.gmra.mxu0 %v32
    %v123 = vpop.f32.mrf.mxu0
    %v124 = vadd.f32 %v95, %v123
    %125 = vmatmul.f32.gmra.mxu0 %v34
    %v126 = vpop.f32.mrf.mxu0
    %v127 = vadd.f32 %v98, %v126
    %128 = vdwg.mxu0
    %v129 = vmax.f32 %v118, 0.0
    %v130 = vmax.f32 %v121, 0.0
    %v131 = vmax.f32 %v124, 0.0
    %v132 = vmax.f32 %v127, 0.0
    %133 = vst [vmem:[#allocation2] sm:$0xff] %v129
    %134 = vst [vmem:[#allocation2 + $0x8] sm:$0xff] %v130
    %135 = vst [vmem:[#allocation2 + $0x10] sm:$0xff] %v131
    %136 = vst [vmem:[#allocation2 + $0x18] sm:$0xff] %v132
    %v137 = vld [vmem:[#allocation2] sm:$0x3]
    %v138 = vld [vmem:[%s3] sm:$0xff]
    %v139 = vld [vmem:[%s3 + $0x8] sm:$0xff]
    %v140 = vld [vmem:[%s3 + $0x10] sm:$0xff]
    %v141 = vld [vmem:[%s3 + $0x18] sm:$0xff]
    %v142 = vld [vmem:[%s3 + $0x20] sm:$0xff]
    %v143 = vld [vmem:[%s3 + $0x28] sm:$0xff]
    %v144 = vld [vmem:[%s3 + $0x30] sm:$0xff]
    %v145 = vld [vmem:[%s3 + $0x38] sm:$0xff]
    %v146 = vld [vmem:[%s3 + $0x40] sm:$0xff]
    %v147 = vld [vmem:[%s3 + $0x48] sm:$0xff]
    %v148 = vld [vmem:[%s3 + $0x50] sm:$0xff]
    %v149 = vld [vmem:[%s3 + $0x58] sm:$0xff]
    %v150 = vld [vmem:[%s3 + $0x60] sm:$0xff]
    %v151 = vld [vmem:[%s3 + $0x68] sm:$0xff]
    %v152 = vld [vmem:[%s3 + $0x70] sm:$0xff]
    %v153 = vld [vmem:[%s3 + $0x78] sm:$0xff]
    %v154 = vld [vmem:[#allocation2 + $0x2] sm:$0x3]
    %v155 = vld [vmem:[%s3 + $0x80] sm:$0xff]
    %v156 = vld [vmem:[%s3 + $0x88] sm:$0xff]
    %v157 = vld [vmem:[%s3 + $0x90] sm:$0xff]
    %v158 = vld [vmem:[%s3 + $0x98] sm:$0xff]
    %v159 = vld [vmem:[%s3 + $0xa0] sm:$0xff]
    %v160 = vld [vmem:[%s3 + $0xa8] sm:$0xff]
    %v161 = vld [vmem:[%s3 + $0xb0] sm:$0xff]
    %v162 = vld [vmem:[%s3 + $0xb8] sm:$0xff]
    %v163 = vld [vmem:[%s3 + $0xc0] sm:$0xff]
    %v164 = vld [vmem:[%s3 + $0xc8] sm:$0xff]
    %v165 = vld [vmem:[%s3 + $0xd0] sm:$0xff]
    %v166 = vld [vmem:[%s3 + $0xd8] sm:$0xff]
    %v167 = vld [vmem:[%s3 + $0xe0] sm:$0xff]
    %v168 = vld [vmem:[%s3 + $0xe8] sm:$0xff]
    %v169 = vld [vmem:[%s3 + $0xf0] sm:$0xff]
    %v170 = vld [vmem:[%s3 + $0xf8] sm:$0xff]
    %171 = vmatpush.msra.mxu0 %v170
    %172 = vmatpush.msra.mxu0 %v169
    %173 = vmatpush.msra.mxu0 %v168
    %174 = vmatpush.msra.mxu0 %v167
    %175 = vmatpush.msra.mxu0 %v166
    %176 = vmatpush.msra.mxu0 %v165
    %177 = vmatpush.msra.mxu0 %v164
    %178 = vmatpush.msra.mxu0 %v163
    %179 = vmatpush.msra.mxu0 %v162
    %180 = vmatpush.msra.mxu0 %v161
    %181 = vmatpush.msra.mxu0 %v160
    %182 = vmatpush.msra.mxu0 %v159
    %183 = vmatpush.msra.mxu0 %v158
    %184 = vmatpush.msra.mxu0 %v157
    %185 = vmatpush.msra.mxu0 %v156
    %186 = vmatpush.msra.mxu0 %v155
    %187 = vmatmul.f32.gmra.mxu0 %v154
    %v188 = vpop.f32.mrf.mxu0
    %v189 = vadd.f32 0.0, %v188
    %190 = vdwg.mxu0
    %191 = vmatpush.msra.mxu0 %v153
    %192 = vmatpush.msra.mxu0 %v152
    %193 = vmatpush.msra.mxu0 %v151
    %194 = vmatpush.msra.mxu0 %v150
    %195 = vmatpush.msra.mxu0 %v149
    %196 = vmatpush.msra.mxu0 %v148
    %197 = vmatpush.msra.mxu0 %v147
    %198 = vmatpush.msra.mxu0 %v146
    %199 = vmatpush.msra.mxu0 %v145
    %200 = vmatpush.msra.mxu0 %v144
    %201 = vmatpush.msra.mxu0 %v143
    %202 = vmatpush.msra.mxu0 %v142
    %203 = vmatpush.msra.mxu0 %v141
    %204 = vmatpush.msra.mxu0 %v140
    %205 = vmatpush.msra.mxu0 %v139
    %206 = vmatpush.msra.mxu0 %v138
    %207 = vmatmul.f32.gmra.mxu0 %v137
    %v208 = vpop.f32.mrf.mxu0
    %v209 = vadd.f32 %v189, %v208
    %210 = vdwg.mxu0
    %v211 = vld [vmem:[#allocation2 + $0x4] sm:$0x3]
    %v212 = vld [vmem:[%s3 + $0x100] sm:$0xff]
    %v213 = vld [vmem:[%s3 + $0x108] sm:$0xff]
    %v214 = vld [vmem:[%s3 + $0x110] sm:$0xff]
    %v215 = vld [vmem:[%s3 + $0x118] sm:$0xff]
    %v216 = vld [vmem:[%s3 + $0x120] sm:$0xff]
    %v217 = vld [vmem:[%s3 + $0x128] sm:$0xff]
    %v218 = vld [vmem:[%s3 + $0x130] sm:$0xff]
    %v219 = vld [vmem:[%s3 + $0x138] sm:$0xff]
    %v220 = vld [vmem:[%s3 + $0x140] sm:$0xff]
    %v221 = vld [vmem:[%s3 + $0x148] sm:$0xff]
    %v222 = vld [vmem:[%s3 + $0x150] sm:$0xff]
    %v223 = vld [vmem:[%s3 + $0x158] sm:$0xff]
    %v224 = vld [vmem:[%s3 + $0x160] sm:$0xff]
    %v225 = vld [vmem:[%s3 + $0x168] sm:$0xff]
    %v226 = vld [vmem:[%s3 + $0x170] sm:$0xff]
    %v227 = vld [vmem:[%s3 + $0x178] sm:$0xff]
    %228 = vmatpush.msra.mxu0 %v227
    %229 = vmatpush.msra.mxu0 %v226
    %230 = vmatpush.msra.mxu0 %v225
    %231 = vmatpush.msra.mxu0 %v224
    %232 = vmatpush.msra.mxu0 %v223
    %233 = vmatpush.msra.mxu0 %v222
    %234 = vmatpush.msra.mxu0 %v221
    %235 = vmatpush.msra.mxu0 %v220
    %236 = vmatpush.msra.mxu0 %v219
    %237 = vmatpush.msra.mxu0 %v218
    %238 = vmatpush.msra.mxu0 %v217
    %239 = vmatpush.msra.mxu0 %v216
    %240 = vmatpush.msra.mxu0 %v215
    %241 = vmatpush.msra.mxu0 %v214
    %242 = vmatpush.msra.mxu0 %v213
    %243 = vmatpush.msra.mxu0 %v212
    %244 = vmatmul.f32.gmra.mxu0 %v211
    %v245 = vpop.f32.mrf.mxu0
    %v246 = vadd.f32 0.0, %v245
    %247 = vdwg.mxu0
    %v248 = vadd.f32 %v209, %v246
    %v249 = vld [vmem:[#allocation2 + $0x6] sm:$0x3]
    %v250 = vld [vmem:[%s3 + $0x180] sm:$0xff]
    %v251 = vld [vmem:[%s3 + $0x188] sm:$0xff]
    %v252 = vld [vmem:[%s3 + $0x190] sm:$0xff]
    %v253 = vld [vmem:[%s3 + $0x198] sm:$0xff]
    %v254 = vld [vmem:[%s3 + $0x1a0] sm:$0xff]
    %v255 = vld [vmem:[%s3 + $0x1a8] sm:$0xff]
    %v256 = vld [vmem:[%s3 + $0x1b0] sm:$0xff]
    %v257 = vld [vmem:[%s3 + $0x1b8] sm:$0xff]
    %v258 = vld [vmem:[%s3 + $0x1c0] sm:$0xff]
    %v259 = vld [vmem:[%s3 + $0x1c8] sm:$0xff]
    %v260 = vld [vmem:[%s3 + $0x1d0] sm:$0xff]
    %v261 = vld [vmem:[%s3 + $0x1d8] sm:$0xff]
    %v262 = vld [vmem:[%s3 + $0x1e0] sm:$0xff]
    %v263 = vld [vmem:[%s3 + $0x1e8] sm:$0xff]
    %v264 = vld [vmem:[%s3 + $0x1f0] sm:$0xff]
    %v265 = vld [vmem:[%s3 + $0x1f8] sm:$0xff]
    %266 = vmatpush.msra.mxu0 %v265
    %267 = vmatpush.msra.mxu0 %v264
    %268 = vmatpush.msra.mxu0 %v263
    %269 = vmatpush.msra.mxu0 %v262
    %270 = vmatpush.msra.mxu0 %v261
    %271 = vmatpush.msra.mxu0 %v260
    %272 = vmatpush.msra.mxu0 %v259
    %273 = vmatpush.msra.mxu0 %v258
    %274 = vmatpush.msra.mxu0 %v257
    %275 = vmatpush.msra.mxu0 %v256
    %276 = vmatpush.msra.mxu0 %v255
    %277 = vmatpush.msra.mxu0 %v254
    %278 = vmatpush.msra.mxu0 %v253
    %279 = vmatpush.msra.mxu0 %v252
    %280 = vmatpush.msra.mxu0 %v251
    %281 = vmatpush.msra.mxu0 %v250
    %282 = vmatmul.f32.gmra.mxu0 %v249
    %v283 = vpop.f32.mrf.mxu0
    %v284 = vadd.f32 0.0, %v283
    %285 = vdwg.mxu0
    %v286 = vadd.f32 %v248, %v284
    %v287 = vld [vmem:[#allocation2 + $0x8] sm:$0x3]
    %v288 = vld [vmem:[%s3 + $0x200] sm:$0xff]
    %v289 = vld [vmem:[%s3 + $0x208] sm:$0xff]
    %v290 = vld [vmem:[%s3 + $0x210] sm:$0xff]
    %v291 = vld [vmem:[%s3 + $0x218] sm:$0xff]
    %v292 = vld [vmem:[%s3 + $0x220] sm:$0xff]
    %v293 = vld [vmem:[%s3 + $0x228] sm:$0xff]
    %v294 = vld [vmem:[%s3 + $0x230] sm:$0xff]
    %v295 = vld [vmem:[%s3 + $0x238] sm:$0xff]
    %v296 = vld [vmem:[%s3 + $0x240] sm:$0xff]
    %v297 = vld [vmem:[%s3 + $0x248] sm:$0xff]
    %v298 = vld [vmem:[%s3 + $0x250] sm:$0xff]
    %v299 = vld [vmem:[%s3 + $0x258] sm:$0xff]
    %v300 = vld [vmem:[%s3 + $0x260] sm:$0xff]
    %v301 = vld [vmem:[%s3 + $0x268] sm:$0xff]
    %v302 = vld [vmem:[%s3 + $0x270] sm:$0xff]
    %v303 = vld [vmem:[%s3 + $0x278] sm:$0xff]
    %304 = vmatpush.msra.mxu0 %v303
    %305 = vmatpush.msra.mxu0 %v302
    %306 = vmatpush.msra.mxu0 %v301
    %307 = vmatpush.msra.mxu0 %v300
    %308 = vmatpush.msra.mxu0 %v299
    %309 = vmatpush.msra.mxu0 %v298
    %310 = vmatpush.msra.mxu0 %v297
    %311 = vmatpush.msra.mxu0 %v296
    %312 = vmatpush.msra.mxu0 %v295
    %313 = vmatpush.msra.mxu0 %v294
    %314 = vmatpush.msra.mxu0 %v293
    %315 = vmatpush.msra.mxu0 %v292
    %316 = vmatpush.msra.mxu0 %v291
    %317 = vmatpush.msra.mxu0 %v290
    %318 = vmatpush.msra.mxu0 %v289
    %319 = vmatpush.msra.mxu0 %v288
    %320 = vmatmul.f32.gmra.mxu0 %v287
    %v321 = vpop.f32.mrf.mxu0
    %v322 = vadd.f32 0.0, %v321
    %323 = vdwg.mxu0
    %v324 = vadd.f32 %v286, %v322
    %v325 = vld [vmem:[#allocation2 + $0xa] sm:$0x3]
    %v326 = vld [vmem:[%s3 + $0x280] sm:$0xff]
    %v327 = vld [vmem:[%s3 + $0x288] sm:$0xff]
    %v328 = vld [vmem:[%s3 + $0x290] sm:$0xff]
    %v329 = vld [vmem:[%s3 + $0x298] sm:$0xff]
    %v330 = vld [vmem:[%s3 + $0x2a0] sm:$0xff]
    %v331 = vld [vmem:[%s3 + $0x2a8] sm:$0xff]
    %v332 = vld [vmem:[%s3 + $0x2b0] sm:$0xff]
    %v333 = vld [vmem:[%s3 + $0x2b8] sm:$0xff]
    %v334 = vld [vmem:[%s3 + $0x2c0] sm:$0xff]
    %v335 = vld [vmem:[%s3 + $0x2c8] sm:$0xff]
    %v336 = vld [vmem:[%s3 + $0x2d0] sm:$0xff]
    %v337 = vld [vmem:[%s3 + $0x2d8] sm:$0xff]
    %v338 = vld [vmem:[%s3 + $0x2e0] sm:$0xff]
    %v339 = vld [vmem:[%s3 + $0x2e8] sm:$0xff]
    %v340 = vld [vmem:[%s3 + $0x2f0] sm:$0xff]
    %v341 = vld [vmem:[%s3 + $0x2f8] sm:$0xff]
    %342 = vmatpush.msra.mxu0 %v341
    %343 = vmatpush.msra.mxu0 %v340
    %344 = vmatpush.msra.mxu0 %v339
    %345 = vmatpush.msra.mxu0 %v338
    %346 = vmatpush.msra.mxu0 %v337
    %347 = vmatpush.msra.mxu0 %v336
    %348 = vmatpush.msra.mxu0 %v335
    %349 = vmatpush.msra.mxu0 %v334
    %350 = vmatpush.msra.mxu0 %v333
    %351 = vmatpush.msra.mxu0 %v332
    %352 = vmatpush.msra.mxu0 %v331
    %353 = vmatpush.msra.mxu0 %v330
    %354 = vmatpush.msra.mxu0 %v329
    %355 = vmatpush.msra.mxu0 %v328
    %356 = vmatpush.msra.mxu0 %v327
    %357 = vmatpush.msra.mxu0 %v326
    %358 = vmatmul.f32.gmra.mxu0 %v325
    %v359 = vpop.f32.mrf.mxu0
    %v360 = vadd.f32 0.0, %v359
    %361 = vdwg.mxu0
    %v362 = vadd.f32 %v324, %v360
    %v363 = vld [vmem:[#allocation2 + $0xc] sm:$0x3]
    %v364 = vld [vmem:[%s3 + $0x300] sm:$0xff]
    %v365 = vld [vmem:[%s3 + $0x308] sm:$0xff]
    %v366 = vld [vmem:[%s3 + $0x310] sm:$0xff]
    %v367 = vld [vmem:[%s3 + $0x318] sm:$0xff]
    %v368 = vld [vmem:[%s3 + $0x320] sm:$0xff]
    %v369 = vld [vmem:[%s3 + $0x328] sm:$0xff]
    %v370 = vld [vmem:[%s3 + $0x330] sm:$0xff]
    %v371 = vld [vmem:[%s3 + $0x338] sm:$0xff]
    %v372 = vld [vmem:[%s3 + $0x340] sm:$0xff]
    %v373 = vld [vmem:[%s3 + $0x348] sm:$0xff]
    %v374 = vld [vmem:[%s3 + $0x350] sm:$0xff]
    %v375 = vld [vmem:[%s3 + $0x358] sm:$0xff]
    %v376 = vld [vmem:[%s3 + $0x360] sm:$0xff]
    %v377 = vld [vmem:[%s3 + $0x368] sm:$0xff]
    %v378 = vld [vmem:[%s3 + $0x370] sm:$0xff]
    %v379 = vld [vmem:[%s3 + $0x378] sm:$0xff]
    %380 = vmatpush.msra.mxu0 %v379
    %381 = vmatpush.msra.mxu0 %v378
    %382 = vmatpush.msra.mxu0 %v377
    %383 = vmatpush.msra.mxu0 %v376
    %384 = vmatpush.msra.mxu0 %v375
    %385 = vmatpush.msra.mxu0 %v374
    %386 = vmatpush.msra.mxu0 %v373
    %387 = vmatpush.msra.mxu0 %v372
    %388 = vmatpush.msra.mxu0 %v371
    %389 = vmatpush.msra.mxu0 %v370
    %390 = vmatpush.msra.mxu0 %v369
    %391 = vmatpush.msra.mxu0 %v368
    %392 = vmatpush.msra.mxu0 %v367
    %393 = vmatpush.msra.mxu0 %v366
    %394 = vmatpush.msra.mxu0 %v365
    %395 = vmatpush.msra.mxu0 %v364
    %396 = vmatmul.f32.gmra.mxu0 %v363
    %v397 = vpop.f32.mrf.mxu0
    %v398 = vadd.f32 0.0, %v397
    %399 = vdwg.mxu0
    %v400 = vadd.f32 %v362, %v398
    %v401 = vld [vmem:[#allocation2 + $0xe] sm:$0x3]
    %v402 = vld [vmem:[%s3 + $0x380] sm:$0xff]
    %v403 = vld [vmem:[%s3 + $0x388] sm:$0xff]
    %v404 = vld [vmem:[%s3 + $0x390] sm:$0xff]
    %v405 = vld [vmem:[%s3 + $0x398] sm:$0xff]
    %v406 = vld [vmem:[%s3 + $0x3a0] sm:$0xff]
    %v407 = vld [vmem:[%s3 + $0x3a8] sm:$0xff]
    %v408 = vld [vmem:[%s3 + $0x3b0] sm:$0xff]
    %v409 = vld [vmem:[%s3 + $0x3b8] sm:$0xff]
    %v410 = vld [vmem:[%s3 + $0x3c0] sm:$0xff]
    %v411 = vld [vmem:[%s3 + $0x3c8] sm:$0xff]
    %v412 = vld [vmem:[%s3 + $0x3d0] sm:$0xff]
    %v413 = vld [vmem:[%s3 + $0x3d8] sm:$0xff]
    %v414 = vld [vmem:[%s3 + $0x3e0] sm:$0xff]
    %v415 = vld [vmem:[%s3 + $0x3e8] sm:$0xff]
    %v416 = vld [vmem:[%s3 + $0x3f0] sm:$0xff]
    %v417 = vld [vmem:[%s3 + $0x3f8] sm:$0xff]
    %418 = vmatpush.msra.mxu0 %v417
    %419 = vmatpush.msra.mxu0 %v416
    %420 = vmatpush.msra.mxu0 %v415
    %421 = vmatpush.msra.mxu0 %v414
    %422 = vmatpush.msra.mxu0 %v413
    %423 = vmatpush.msra.mxu0 %v412
    %424 = vmatpush.msra.mxu0 %v411
    %425 = vmatpush.msra.mxu0 %v410
    %426 = vmatpush.msra.mxu0 %v409
    %427 = vmatpush.msra.mxu0 %v408
    %428 = vmatpush.msra.mxu0 %v407
    %429 = vmatpush.msra.mxu0 %v406
    %430 = vmatpush.msra.mxu0 %v405
    %431 = vmatpush.msra.mxu0 %v404
    %432 = vmatpush.msra.mxu0 %v403
    %433 = vmatpush.msra.mxu0 %v402
    %434 = vmatmul.f32.gmra.mxu0 %v401
    %v435 = vpop.f32.mrf.mxu0
    %v436 = vadd.f32 0.0, %v435
    %437 = vdwg.mxu0
    %v438 = vadd.f32 %v400, %v436
    %v439 = vld [vmem:[#allocation2 + $0x10] sm:$0x3]
    %v440 = vld [vmem:[%s3 + $0x400] sm:$0xff]
    %v441 = vld [vmem:[%s3 + $0x408] sm:$0xff]
    %v442 = vld [vmem:[%s3 + $0x410] sm:$0xff]
    %v443 = vld [vmem:[%s3 + $0x418] sm:$0xff]
    %v444 = vld [vmem:[%s3 + $0x420] sm:$0xff]
    %v445 = vld [vmem:[%s3 + $0x428] sm:$0xff]
    %v446 = vld [vmem:[%s3 + $0x430] sm:$0xff]
    %v447 = vld [vmem:[%s3 + $0x438] sm:$0xff]
    %v448 = vld [vmem:[%s3 + $0x440] sm:$0xff]
    %v449 = vld [vmem:[%s3 + $0x448] sm:$0xff]
    %v450 = vld [vmem:[%s3 + $0x450] sm:$0xff]
    %v451 = vld [vmem:[%s3 + $0x458] sm:$0xff]
    %v452 = vld [vmem:[%s3 + $0x460] sm:$0xff]
    %v453 = vld [vmem:[%s3 + $0x468] sm:$0xff]
    %v454 = vld [vmem:[%s3 + $0x470] sm:$0xff]
    %v455 = vld [vmem:[%s3 + $0x478] sm:$0xff]
    %456 = vmatpush.msra.mxu0 %v455
    %457 = vmatpush.msra.mxu0 %v454
    %458 = vmatpush.msra.mxu0 %v453
    %459 = vmatpush.msra.mxu0 %v452
    %460 = vmatpush.msra.mxu0 %v451
    %461 = vmatpush.msra.mxu0 %v450
    %462 = vmatpush.msra.mxu0 %v449
    %463 = vmatpush.msra.mxu0 %v448
    %464 = vmatpush.msra.mxu0 %v447
    %465 = vmatpush.msra.mxu0 %v446
    %466 = vmatpush.msra.mxu0 %v445
    %467 = vmatpush.msra.mxu0 %v444
    %468 = vmatpush.msra.mxu0 %v443
    %469 = vmatpush.msra.mxu0 %v442
    %470 = vmatpush.msra.mxu0 %v441
    %471 = vmatpush.msra.mxu0 %v440
    %472 = vmatmul.f32.gmra.mxu0 %v439
    %v473 = vpop.f32.mrf.mxu0
    %v474 = vadd.f32 0.0, %v473
    %475 = vdwg.mxu0
    %v476 = vadd.f32 %v438, %v474
    %v477 = vld [vmem:[#allocation2 + $0x12] sm:$0x3]
    %v478 = vld [vmem:[%s3 + $0x480] sm:$0xff]
    %v479 = vld [vmem:[%s3 + $0x488] sm:$0xff]
    %v480 = vld [vmem:[%s3 + $0x490] sm:$0xff]
    %v481 = vld [vmem:[%s3 + $0x498] sm:$0xff]
    %v482 = vld [vmem:[%s3 + $0x4a0] sm:$0xff]
    %v483 = vld [vmem:[%s3 + $0x4a8] sm:$0xff]
    %v484 = vld [vmem:[%s3 + $0x4b0] sm:$0xff]
    %v485 = vld [vmem:[%s3 + $0x4b8] sm:$0xff]
    %v486 = vld [vmem:[%s3 + $0x4c0] sm:$0xff]
    %v487 = vld [vmem:[%s3 + $0x4c8] sm:$0xff]
    %v488 = vld [vmem:[%s3 + $0x4d0] sm:$0xff]
    %v489 = vld [vmem:[%s3 + $0x4d8] sm:$0xff]
    %v490 = vld [vmem:[%s3 + $0x4e0] sm:$0xff]
    %v491 = vld [vmem:[%s3 + $0x4e8] sm:$0xff]
    %v492 = vld [vmem:[%s3 + $0x4f0] sm:$0xff]
    %v493 = vld [vmem:[%s3 + $0x4f8] sm:$0xff]
    %494 = vmatpush.msra.mxu0 %v493
    %495 = vmatpush.msra.mxu0 %v492
    %496 = vmatpush.msra.mxu0 %v491
    %497 = vmatpush.msra.mxu0 %v490
    %498 = vmatpush.msra.mxu0 %v489
    %499 = vmatpush.msra.mxu0 %v488
    %500 = vmatpush.msra.mxu0 %v487
    %501 = vmatpush.msra.mxu0 %v486
    %502 = vmatpush.msra.mxu0 %v485
    %503 = vmatpush.msra.mxu0 %v484
    %504 = vmatpush.msra.mxu0 %v483
    %505 = vmatpush.msra.mxu0 %v482
    %506 = vmatpush.msra.mxu0 %v481
    %507 = vmatpush.msra.mxu0 %v480
    %508 = vmatpush.msra.mxu0 %v479
    %509 = vmatpush.msra.mxu0 %v478
    %510 = vmatmul.f32.gmra.mxu0 %v477
    %v511 = vpop.f32.mrf.mxu0
    %v512 = vadd.f32 0.0, %v511
    %513 = vdwg.mxu0
    %v514 = vadd.f32 %v476, %v512
    %v515 = vld [vmem:[#allocation2 + $0x14] sm:$0x3]
    %v516 = vld [vmem:[%s3 + $0x500] sm:$0xff]
    %v517 = vld [vmem:[%s3 + $0x508] sm:$0xff]
    %v518 = vld [vmem:[%s3 + $0x510] sm:$0xff]
    %v519 = vld [vmem:[%s3 + $0x518] sm:$0xff]
    %v520 = vld [vmem:[%s3 + $0x520] sm:$0xff]
    %v521 = vld [vmem:[%s3 + $0x528] sm:$0xff]
    %v522 = vld [vmem:[%s3 + $0x530] sm:$0xff]
    %v523 = vld [vmem:[%s3 + $0x538] sm:$0xff]
    %v524 = vld [vmem:[%s3 + $0x540] sm:$0xff]
    %v525 = vld [vmem:[%s3 + $0x548] sm:$0xff]
    %v526 = vld [vmem:[%s3 + $0x550] sm:$0xff]
    %v527 = vld [vmem:[%s3 + $0x558] sm:$0xff]
    %v528 = vld [vmem:[%s3 + $0x560] sm:$0xff]
    %v529 = vld [vmem:[%s3 + $0x568] sm:$0xff]
    %v530 = vld [vmem:[%s3 + $0x570] sm:$0xff]
    %v531 = vld [vmem:[%s3 + $0x578] sm:$0xff]
    %532 = vmatpush.msra.mxu0 %v531
    %533 = vmatpush.msra.mxu0 %v530
    %534 = vmatpush.msra.mxu0 %v529
    %535 = vmatpush.msra.mxu0 %v528
    %536 = vmatpush.msra.mxu0 %v527
    %537 = vmatpush.msra.mxu0 %v526
    %538 = vmatpush.msra.mxu0 %v525
    %539 = vmatpush.msra.mxu0 %v524
    %540 = vmatpush.msra.mxu0 %v523
    %541 = vmatpush.msra.mxu0 %v522
    %542 = vmatpush.msra.mxu0 %v521
    %543 = vmatpush.msra.mxu0 %v520
    %544 = vmatpush.msra.mxu0 %v519
    %545 = vmatpush.msra.mxu0 %v518
    %546 = vmatpush.msra.mxu0 %v517
    %547 = vmatpush.msra.mxu0 %v516
    %548 = vmatmul.f32.gmra.mxu0 %v515
    %v549 = vpop.f32.mrf.mxu0
    %v550 = vadd.f32 0.0, %v549
    %551 = vdwg.mxu0
    %v552 = vadd.f32 %v514, %v550
    %v553 = vld [vmem:[#allocation2 + $0x16] sm:$0x3]
    %v554 = vld [vmem:[%s3 + $0x580] sm:$0xff]
    %v555 = vld [vmem:[%s3 + $0x588] sm:$0xff]
    %v556 = vld [vmem:[%s3 + $0x590] sm:$0xff]
    %v557 = vld [vmem:[%s3 + $0x598] sm:$0xff]
    %v558 = vld [vmem:[%s3 + $0x5a0] sm:$0xff]
    %v559 = vld [vmem:[%s3 + $0x5a8] sm:$0xff]
    %v560 = vld [vmem:[%s3 + $0x5b0] sm:$0xff]
    %v561 = vld [vmem:[%s3 + $0x5b8] sm:$0xff]
    %v562 = vld [vmem:[%s3 + $0x5c0] sm:$0xff]
    %v563 = vld [vmem:[%s3 + $0x5c8] sm:$0xff]
    %v564 = vld [vmem:[%s3 + $0x5d0] sm:$0xff]
    %v565 = vld [vmem:[%s3 + $0x5d8] sm:$0xff]
    %v566 = vld [vmem:[%s3 + $0x5e0] sm:$0xff]
    %v567 = vld [vmem:[%s3 + $0x5e8] sm:$0xff]
    %v568 = vld [vmem:[%s3 + $0x5f0] sm:$0xff]
    %v569 = vld [vmem:[%s3 + $0x5f8] sm:$0xff]
    %570 = vmatpush.msra.mxu0 %v569
    %571 = vmatpush.msra.mxu0 %v568
    %572 = vmatpush.msra.mxu0 %v567
    %573 = vmatpush.msra.mxu0 %v566
    %574 = vmatpush.msra.mxu0 %v565
    %575 = vmatpush.msra.mxu0 %v564
    %576 = vmatpush.msra.mxu0 %v563
    %577 = vmatpush.msra.mxu0 %v562
    %578 = vmatpush.msra.mxu0 %v561
    %579 = vmatpush.msra.mxu0 %v560
    %580 = vmatpush.msra.mxu0 %v559
    %581 = vmatpush.msra.mxu0 %v558
    %582 = vmatpush.msra.mxu0 %v557
    %583 = vmatpush.msra.mxu0 %v556
    %584 = vmatpush.msra.mxu0 %v555
    %585 = vmatpush.msra.mxu0 %v554
    %586 = vmatmul.f32.gmra.mxu0 %v553
    %v587 = vpop.f32.mrf.mxu0
    %v588 = vadd.f32 0.0, %v587
    %589 = vdwg.mxu0
    %v590 = vadd.f32 %v552, %v588
    %v591 = vld [vmem:[#allocation2 + $0x18] sm:$0x3]
    %v592 = vld [vmem:[%s3 + $0x600] sm:$0xff]
    %v593 = vld [vmem:[%s3 + $0x608] sm:$0xff]
    %v594 = vld [vmem:[%s3 + $0x610] sm:$0xff]
    %v595 = vld [vmem:[%s3 + $0x618] sm:$0xff]
    %v596 = vld [vmem:[%s3 + $0x620] sm:$0xff]
    %v597 = vld [vmem:[%s3 + $0x628] sm:$0xff]
    %v598 = vld [vmem:[%s3 + $0x630] sm:$0xff]
    %v599 = vld [vmem:[%s3 + $0x638] sm:$0xff]
    %v600 = vld [vmem:[%s3 + $0x640] sm:$0xff]
    %v601 = vld [vmem:[%s3 + $0x648] sm:$0xff]
    %v602 = vld [vmem:[%s3 + $0x650] sm:$0xff]
    %v603 = vld [vmem:[%s3 + $0x658] sm:$0xff]
    %v604 = vld [vmem:[%s3 + $0x660] sm:$0xff]
    %v605 = vld [vmem:[%s3 + $0x668] sm:$0xff]
    %v606 = vld [vmem:[%s3 + $0x670] sm:$0xff]
    %v607 = vld [vmem:[%s3 + $0x678] sm:$0xff]
    %608 = vmatpush.msra.mxu0 %v607
    %609 = vmatpush.msra.mxu0 %v606
    %610 = vmatpush.msra.mxu0 %v605
    %611 = vmatpush.msra.mxu0 %v604
    %612 = vmatpush.msra.mxu0 %v603
    %613 = vmatpush.msra.mxu0 %v602
    %614 = vmatpush.msra.mxu0 %v601
    %615 = vmatpush.msra.mxu0 %v600
    %616 = vmatpush.msra.mxu0 %v599
    %617 = vmatpush.msra.mxu0 %v598
    %618 = vmatpush.msra.mxu0 %v597
    %619 = vmatpush.msra.mxu0 %v596
    %620 = vmatpush.msra.mxu0 %v595
    %621 = vmatpush.msra.mxu0 %v594
    %622 = vmatpush.msra.mxu0 %v593
    %623 = vmatpush.msra.mxu0 %v592
    %624 = vmatmul.f32.gmra.mxu0 %v591
    %v625 = vpop.f32.mrf.mxu0
    %v626 = vadd.f32 0.0, %v625
    %627 = vdwg.mxu0
    %v628 = vadd.f32 %v590, %v626
    %v629 = vld [vmem:[#allocation2 + $0x1a] sm:$0x3]
    %v630 = vld [vmem:[%s3 + $0x680] sm:$0xff]
    %v631 = vld [vmem:[%s3 + $0x688] sm:$0xff]
    %v632 = vld [vmem:[%s3 + $0x690] sm:$0xff]
    %v633 = vld [vmem:[%s3 + $0x698] sm:$0xff]
    %v634 = vld [vmem:[%s3 + $0x6a0] sm:$0xff]
    %v635 = vld [vmem:[%s3 + $0x6a8] sm:$0xff]
    %v636 = vld [vmem:[%s3 + $0x6b0] sm:$0xff]
    %v637 = vld [vmem:[%s3 + $0x6b8] sm:$0xff]
    %v638 = vld [vmem:[%s3 + $0x6c0] sm:$0xff]
    %v639 = vld [vmem:[%s3 + $0x6c8] sm:$0xff]
    %v640 = vld [vmem:[%s3 + $0x6d0] sm:$0xff]
    %v641 = vld [vmem:[%s3 + $0x6d8] sm:$0xff]
    %v642 = vld [vmem:[%s3 + $0x6e0] sm:$0xff]
    %v643 = vld [vmem:[%s3 + $0x6e8] sm:$0xff]
    %v644 = vld [vmem:[%s3 + $0x6f0] sm:$0xff]
    %v645 = vld [vmem:[%s3 + $0x6f8] sm:$0xff]
    %646 = vmatpush.msra.mxu0 %v645
    %647 = vmatpush.msra.mxu0 %v644
    %648 = vmatpush.msra.mxu0 %v643
    %649 = vmatpush.msra.mxu0 %v642
    %650 = vmatpush.msra.mxu0 %v641
    %651 = vmatpush.msra.mxu0 %v640
    %652 = vmatpush.msra.mxu0 %v639
    %653 = vmatpush.msra.mxu0 %v638
    %654 = vmatpush.msra.mxu0 %v637
    %655 = vmatpush.msra.mxu0 %v636
    %656 = vmatpush.msra.mxu0 %v635
    %657 = vmatpush.msra.mxu0 %v634
    %658 = vmatpush.msra.mxu0 %v633
    %659 = vmatpush.msra.mxu0 %v632
    %660 = vmatpush.msra.mxu0 %v631
    %661 = vmatpush.msra.mxu0 %v630
    %662 = vmatmul.f32.gmra.mxu0 %v629
    %v663 = vpop.f32.mrf.mxu0
    %v664 = vadd.f32 0.0, %v663
    %665 = vdwg.mxu0
    %v666 = vadd.f32 %v628, %v664
    %v667 = vld [vmem:[#allocation2 + $0x1c] sm:$0x3]
    %v668 = vld [vmem:[%s3 + $0x700] sm:$0xff]
    %v669 = vld [vmem:[%s3 + $0x708] sm:$0xff]
    %v670 = vld [vmem:[%s3 + $0x710] sm:$0xff]
    %v671 = vld [vmem:[%s3 + $0x718] sm:$0xff]
    %v672 = vld [vmem:[%s3 + $0x720] sm:$0xff]
    %v673 = vld [vmem:[%s3 + $0x728] sm:$0xff]
    %v674 = vld [vmem:[%s3 + $0x730] sm:$0xff]
    %v675 = vld [vmem:[%s3 + $0x738] sm:$0xff]
    %v676 = vld [vmem:[%s3 + $0x740] sm:$0xff]
    %v677 = vld [vmem:[%s3 + $0x748] sm:$0xff]
    %v678 = vld [vmem:[%s3 + $0x750] sm:$0xff]
    %v679 = vld [vmem:[%s3 + $0x758] sm:$0xff]
    %v680 = vld [vmem:[%s3 + $0x760] sm:$0xff]
    %v681 = vld [vmem:[%s3 + $0x768] sm:$0xff]
    %v682 = vld [vmem:[%s3 + $0x770] sm:$0xff]
    %v683 = vld [vmem:[%s3 + $0x778] sm:$0xff]
    %684 = vmatpush.msra.mxu0 %v683
    %685 = vmatpush.msra.mxu0 %v682
    %686 = vmatpush.msra.mxu0 %v681
    %687 = vmatpush.msra.mxu0 %v680
    %688 = vmatpush.msra.mxu0 %v679
    %689 = vmatpush.msra.mxu0 %v678
    %690 = vmatpush.msra.mxu0 %v677
    %691 = vmatpush.msra.mxu0 %v676
    %692 = vmatpush.msra.mxu0 %v675
    %693 = vmatpush.msra.mxu0 %v674
    %694 = vmatpush.msra.mxu0 %v673
    %695 = vmatpush.msra.mxu0 %v672
    %696 = vmatpush.msra.mxu0 %v671
    %697 = vmatpush.msra.mxu0 %v670
    %698 = vmatpush.msra.mxu0 %v669
    %699 = vmatpush.msra.mxu0 %v668
    %700 = vmatmul.f32.gmra.mxu0 %v667
    %v701 = vpop.f32.mrf.mxu0
    %v702 = vadd.f32 0.0, %v701
    %703 = vdwg.mxu0
    %v704 = vadd.f32 %v666, %v702
    %v705 = vld [vmem:[#allocation2 + $0x1e] sm:$0x3]
    %v706 = vld [vmem:[%s3 + $0x780] sm:$0xff]
    %v707 = vld [vmem:[%s3 + $0x788] sm:$0xff]
    %v708 = vld [vmem:[%s3 + $0x790] sm:$0xff]
    %v709 = vld [vmem:[%s3 + $0x798] sm:$0xff]
    %v710 = vld [vmem:[%s3 + $0x7a0] sm:$0xff]
    %v711 = vld [vmem:[%s3 + $0x7a8] sm:$0xff]
    %v712 = vld [vmem:[%s3 + $0x7b0] sm:$0xff]
    %v713 = vld [vmem:[%s3 + $0x7b8] sm:$0xff]
    %v714 = vld [vmem:[%s3 + $0x7c0] sm:$0xff]
    %v715 = vld [vmem:[%s3 + $0x7c8] sm:$0xff]
    %v716 = vld [vmem:[%s3 + $0x7d0] sm:$0xff]
    %v717 = vld [vmem:[%s3 + $0x7d8] sm:$0xff]
    %v718 = vld [vmem:[%s3 + $0x7e0] sm:$0xff]
    %v719 = vld [vmem:[%s3 + $0x7e8] sm:$0xff]
    %v720 = vld [vmem:[%s3 + $0x7f0] sm:$0xff]
    %v721 = vld [vmem:[%s3 + $0x7f8] sm:$0xff]
    %722 = vmatpush.msra.mxu0 %v721
    %723 = vmatpush.msra.mxu0 %v720
    %724 = vmatpush.msra.mxu0 %v719
    %725 = vmatpush.msra.mxu0 %v718
    %726 = vmatpush.msra.mxu0 %v717
    %727 = vmatpush.msra.mxu0 %v716
    %728 = vmatpush.msra.mxu0 %v715
    %729 = vmatpush.msra.mxu0 %v714
    %730 = vmatpush.msra.mxu0 %v713
    %731 = vmatpush.msra.mxu0 %v712
    %732 = vmatpush.msra.mxu0 %v711
    %733 = vmatpush.msra.mxu0 %v710
    %734 = vmatpush.msra.mxu0 %v709
    %735 = vmatpush.msra.mxu0 %v708
    %736 = vmatpush.msra.mxu0 %v707
    %737 = vmatpush.msra.mxu0 %v706
    %738 = vmatmul.f32.gmra.mxu0 %v705
    %v739 = vpop.f32.mrf.mxu0
    %v740 = vadd.f32 0.0, %v739
    %741 = vdwg.mxu0
    %v742 = vadd.f32 %v704, %v740
    %v743 = vld [vmem:[%s4] sm:$0x1]
    %v745 = vperm.slane %v743, 0
    %v747 = vadd.f32 %v742, %v745
    %v748 = vmax.f32 %v747, 0.0
    %v749 = vld [vmem:[%s5] sm:$0xff]
    %v750 = vld [vmem:[%s5 + $0x8] sm:$0xff]
    %v751 = vld [vmem:[%s5 + $0x10] sm:$0xff]
    %v752 = vld [vmem:[%s5 + $0x18] sm:$0xff]
    %v753 = vld [vmem:[%s5 + $0x20] sm:$0xff]
    %v754 = vld [vmem:[%s5 + $0x28] sm:$0xff]
    %v755 = vld [vmem:[%s5 + $0x30] sm:$0xff]
    %v756 = vld [vmem:[%s5 + $0x38] sm:$0xff]
    %v757 = vld [vmem:[%s5 + $0x40] sm:$0xff]
    %v758 = vld [vmem:[%s5 + $0x48] sm:$0xff]
    %v759 = vld [vmem:[%s5 + $0x50] sm:$0xff]
    %v760 = vld [vmem:[%s5 + $0x58] sm:$0xff]
    %v761 = vld [vmem:[%s5 + $0x60] sm:$0xff]
    %v762 = vld [vmem:[%s5 + $0x68] sm:$0xff]
    %v763 = vld [vmem:[%s5 + $0x70] sm:$0xff]
    %v764 = vld [vmem:[%s5 + $0x78] sm:$0xff]
    %v765 = vld [vmem:[%s6] sm:$0x1]
    %v767 = vperm.slane %v765, 0
    %769 = vmatpush.msra.mxu0 %v764
    %770 = vmatpush.msra.mxu0 %v763
    %771 = vmatpush.msra.mxu0 %v762
    %772 = vmatpush.msra.mxu0 %v761
    %773 = vmatpush.msra.mxu0 %v760
    %774 = vmatpush.msra.mxu0 %v759
    %775 = vmatpush.msra.mxu0 %v758
    %776 = vmatpush.msra.mxu0 %v757
    %777 = vmatpush.msra.mxu0 %v756
    %778 = vmatpush.msra.mxu0 %v755
    %779 = vmatpush.msra.mxu0 %v754
    %780 = vmatpush.msra.mxu0 %v753
    %781 = vmatpush.msra.mxu0 %v752
    %782 = vmatpush.msra.mxu0 %v751
    %783 = vmatpush.msra.mxu0 %v750
    %784 = vmatpush.msra.mxu0 %v749
    %785 = vmatmul.f32.gmra.mxu0 %v748
    %v786 = vpop.f32.mrf.mxu0
    %v787 = vadd.f32 %v767, %v786
    %788 = vdwg.mxu0
    %vm789 = vcmask 66560
    %790 = vst.msk [vmem:[#allocation3] sm:$0x3] %vm789, %v787
    // Predicated region
    $region30: #{dropout_policy_forward.1} parent=1 // pred_check
      _
    $region31: #{dropout_policy_forward.1} parent=1 // pred_check_branch
      %792 = sbr.rel (0) target = $region33
    $region32: #{dropout_policy_forward.1} parent=1 // pred_region
      %794 = vsyncadd [#allocation4], 0
      %s796 = sshll.u32 [#allocation3], 4
      %s797 = int_to_ptr.vmem [resolvable:$true] %s796
      %s798 = sshll.u32 %s7, 4
      %s799 = int_to_ptr.hbm [resolvable:$true] %s798
      %801 = dma.vmem_to_hbm [thread:$0]  %s797, 32, %s799, [#allocation4]
    $region33: #{dropout_policy_forward.1} parent=1 // pred_fallthru
      _
    // Predicated region
    $region34: #{dropout_policy_forward.1} parent=1 // pred_check
      _
    $region35: #{dropout_policy_forward.1} parent=1 // pred_check_branch
      %803 = sbr.rel (0) target = $region37
    $region36: #{dropout_policy_forward.1} parent=1 // pred_region
      %805 = dma.done [#allocation4], 32
    $region37: #{dropout_policy_forward.1} parent=1 // pred_fallthru
      _
    %806 = vsyncpa [#allocation4], 1

</llo_original>
